<compile_context>
chip_gen: v6e
topology: v6e:2x2x1
jax: 0.10.0
libtpu: 0.0.40
codegen_flags: <defaults>
</compile_context>

<pallas_src>
import functools

import numpy as np
import jax
import jax.numpy as jnp
from jax.experimental import pallas as pl
from jax.experimental.pallas import tpu as pltpu

_EPS = 1e-6


def _dice_partial_kernel(x_ref, t_ref, inter_ref, psq_ref, tsq_ref,
                         *, ms_valid, use_sigmoid, mask_softmax_pad):
    """Grid = (N, M_tiles). One step processes a (C, TM) slab of one sample.

    x_ref:     (C, TM) logits (any float dtype), channel-major within sample
    t_ref:     (1, TM) int32 class ids (padded cols hold -1)
    inter_ref: (C, 1)  f32 running sum of p * onehot   (per sample n)
    psq_ref:   (C, 1)  f32 running sum of p^2          (per sample n)
    tsq_ref:   (C, 1)  f32 running sum of onehot       (per sample n)
    The three outputs are resident across the m axis (same block for all m).
    """
    m = pl.program_id(1)
    C, TM = x_ref.shape

    @pl.when(m == 0)
    def _():
        inter_ref[...] = jnp.zeros_like(inter_ref)
        psq_ref[...] = jnp.zeros_like(psq_ref)
        tsq_ref[...] = jnp.zeros_like(tsq_ref)

    x = x_ref[...].astype(jnp.float32)                       # cast on-chip
    if use_sigmoid:
        # padded logits are -1e9 -> sigmoid == 0, so no masking needed.
        p = jax.nn.sigmoid(x)                                # nn.Sigmoid()
    else:
        p = jax.nn.softmax(x, axis=0)                        # nn.Softmax(dim=1)
        if mask_softmax_pad:
            # softmax of padded columns is 1/C per channel -> mask them out.
            col = m * TM + jax.lax.broadcasted_iota(jnp.int32, (1, TM), 1)
            p = p * (col < ms_valid).astype(jnp.float32)

    # one-hot of the integer target along the channel (sublane) axis
    chan = jax.lax.broadcasted_iota(jnp.int32, (C, TM), 0)
    onehot_mask = t_ref[...] == chan                         # (C, TM) bool

    inter_ref[...] += jnp.sum(jnp.where(onehot_mask, p, 0.0),
                              axis=1, keepdims=True)
    psq_ref[...] += jnp.sum(p * p, axis=1, keepdims=True)
    # onehot * onehot == onehot, so just count hits.
    tsq_ref[...] += jnp.sum(jnp.where(onehot_mask, 1.0, 0.0),
                            axis=1, keepdims=True)


def _pick_tile_m(ms, c, itemsize,
                 vmem_budget_bytes=20 * 1024 * 1024,
                 max_tile=256 * 1024):
    """Largest lane-tile (multiple of 128) whose double-buffered input blocks
    (logits slab + int32 label row) fit the per-generation VMEM budget
    (20 MiB keeps headroom even under v7x's 64 MiB / 32 MiB-scoped VMEM)."""
    per_lane = 2 * (c * itemsize + 4)          # double-buffered bytes per lane
    cap = max(128, (vmem_budget_bytes // per_lane) // 128 * 128)
    cap = min(cap, max_tile)
    ms_pad128 = pl.cdiv(ms, 128) * 128
    return min(cap, ms_pad128)


def dice_loss_forward(logits, target, weight=None, sigmoid_normalization=True,
                      tile_m=None):
    """Mirrors _AbstractDiceLoss.forward with the canonical per-channel dice.

    logits: (N, C, D, H, W) float; target: (N, D, H, W) integer class ids.
    Returns (loss, per_channel_dice) as DEVICE arrays (no forced host sync).
    """
    # TODO(synk): `dice()` is abstract in the base class; the canonical
    # compute_per_channel_dice from the DiceLoss subclass is implemented here.
    # TODO(synk): skip_index_after / self.classes are None in the base class
    # and are not modelled; the original also returns per_channel_dice as a
    # host numpy array — the host copy is left to the caller.
    N, C, D, H, W = logits.shape
    Ms = D * H * W

    # Layout-preserving reshapes only (no transpose -> no extra HBM round-trip).
    x = logits.reshape(N, C, Ms)
    t = target.astype(jnp.int32).reshape(N, 1, Ms)

    if tile_m is None:
        tile_m = _pick_tile_m(Ms, C, jnp.dtype(logits.dtype).itemsize)

    m_pad = pl.cdiv(Ms, tile_m) * tile_m
    has_pad = m_pad != Ms
    if has_pad:
        # -1e9: sigmoid -> 0 (no psq pollution); labels -1 -> one-hot all zero.
        x = jnp.pad(x, ((0, 0), (0, 0), (0, m_pad - Ms)), constant_values=-1e9)
        t = jnp.pad(t, ((0, 0), (0, 0), (0, m_pad - Ms)), constant_values=-1)

    grid = (N, m_pad // tile_m)
    kernel = functools.partial(
        _dice_partial_kernel,
        ms_valid=Ms,
        use_sigmoid=sigmoid_normalization,
        mask_softmax_pad=(has_pad and not sigmoid_normalization))

    part_shape = jax.ShapeDtypeStruct((N, C, 1), jnp.float32)
    part_spec = pl.BlockSpec((None, C, 1), lambda n, m: (n, 0, 0))

    inter, psq, tsq = pl.pallas_call(
        kernel,
        out_shape=(part_shape, part_shape, part_shape),
        grid_spec=pltpu.PrefetchScalarGridSpec(
            num_scalar_prefetch=0,
            grid=grid,
            in_specs=[
                pl.BlockSpec((None, C, tile_m), lambda n, m: (n, 0, m)),
                pl.BlockSpec((None, 1, tile_m), lambda n, m: (n, 0, m)),
            ],
            out_specs=(part_spec, part_spec, part_spec),
        ),
        compiler_params=pltpu.CompilerParams(
            dimension_semantics=("parallel", "arbitrary"),
            vmem_limit_bytes=32 * 1024 * 1024),
    )(x, t)

    # Tiny final reduction over the batch axis + dice ratio in plain JAX.
    inter_c = jnp.sum(inter[:, :, 0], axis=0)
    psq_c = jnp.sum(psq[:, :, 0], axis=0)
    tsq_c = jnp.sum(tsq[:, :, 0], axis=0)

    if weight is not None:
        # Matches compute_per_channel_dice: weight scales the intersect term.
        inter_c = inter_c * weight.astype(jnp.float32)

    denom = jnp.maximum(psq_c + tsq_c, _EPS)
    per_channel_dice = 2.0 * inter_c / denom
    loss = 1.0 - jnp.mean(per_channel_dice)
    return loss, per_channel_dice


def _reference(logits, target, weight=None, sigmoid_normalization=True):
    C = logits.shape[1]
    onehot = jax.nn.one_hot(target, C, axis=1, dtype=jnp.float32)
    p = (jax.nn.sigmoid(logits) if sigmoid_normalization
         else jax.nn.softmax(logits, axis=1))
    pf = jnp.transpose(p, (1, 0, 2, 3, 4)).reshape(C, -1)
    tf = jnp.transpose(onehot, (1, 0, 2, 3, 4)).reshape(C, -1)
    intersect = jnp.sum(pf * tf, axis=1)
    if weight is not None:
        intersect = intersect * weight
    denom = jnp.maximum(jnp.sum(pf * pf, -1) + jnp.sum(tf * tf, -1), _EPS)
    dice = 2.0 * intersect / denom
    return 1.0 - jnp.mean(dice), dice


if __name__ == "__main__":
    key = jax.random.PRNGKey(0)
    k1, k2 = jax.random.split(key)

    # main test: N=2, C=4, spatial 8x16x16
    N, C, D, H, W = 2, 4, 8, 16, 16
    logits = jax.random.normal(k1, (N, C, D, H, W), dtype=jnp.float32)
    target = jax.random.randint(k2, (N, D, H, W), 0, C, dtype=jnp.int32)

    loss, per_channel_dice = dice_loss_forward(
        logits, target, weight=None, sigmoid_normalization=True)
    loss = jax.block_until_ready(loss)
    per_channel_dice = jax.block_until_ready(per_channel_dice)

    ref_loss, ref_dice = _reference(logits, target)
    np.testing.assert_allclose(float(loss), float(ref_loss), rtol=1e-5, atol=1e-5)
    np.testing.assert_allclose(np.asarray(jax.device_get(per_channel_dice)),
                               np.asarray(jax.device_get(ref_dice)),
                               rtol=1e-5, atol=1e-5)

    # softmax-normalization path
    loss_sm, dice_sm = dice_loss_forward(logits, target,
                                         sigmoid_normalization=False)
    ref_loss_sm, ref_dice_sm = _reference(logits, target,
                                          sigmoid_normalization=False)
    np.testing.assert_allclose(float(jax.block_until_ready(loss_sm)),
                               float(ref_loss_sm), rtol=1e-5, atol=1e-5)
    np.testing.assert_allclose(np.asarray(jax.device_get(dice_sm)),
                               np.asarray(jax.device_get(ref_dice_sm)),
                               rtol=1e-5, atol=1e-5)

    # ragged spatial size -> exercises padded-tile handling (sigmoid & softmax)
    N2, C2, D2, H2, W2 = 2, 3, 3, 5, 7
    logits2 = jax.random.normal(k1, (N2, C2, D2, H2, W2), dtype=jnp.float32)
    target2 = jax.random.randint(k2, (N2, D2, H2, W2), 0, C2, dtype=jnp.int32)
    for sig in (True, False):
        l2, d2 = dice_loss_forward(logits2, target2, sigmoid_normalization=sig)
        rl2, rd2 = _reference(logits2, target2, sigmoid_normalization=sig)
        np.testing.assert_allclose(float(jax.block_until_ready(l2)), float(rl2),
                                   rtol=1e-5, atol=1e-5)
        np.testing.assert_allclose(np.asarray(jax.device_get(d2)),
                                   np.asarray(jax.device_get(rd2)),
                                   rtol=1e-5, atol=1e-5)

    print("KERNEL_OK")
</pallas_src>

<mosaic_0001>
module attributes {stable_mosaic.version = 11 : i64} {
  func.func @_dice_partial_kernel(%arg0: i32, %arg1: i32, %arg2: memref<1x4x2048xf32, #tpu.memory_space<vmem>>, %arg3: memref<1x1x2048xi32, #tpu.memory_space<vmem>>, %arg4: memref<1x4x1xf32, #tpu.memory_space<vmem>>, %arg5: memref<1x4x1xf32, #tpu.memory_space<vmem>>, %arg6: memref<1x4x1xf32, #tpu.memory_space<vmem>>) attributes {dimension_semantics = [#tpu.dimension_semantics<parallel>, #tpu.dimension_semantics<arbitrary>], iteration_bounds = array<i64: 2, 1>, scalar_prefetch = 0 : i64, scratch_operands = 0 : i64, tpu.core_type = #tpu.core_type<tc>, window_params = [{transform_indices = @transform_0, window_bounds = array<i64: 1, 4, 2048>}, {transform_indices = @transform_1, window_bounds = array<i64: 1, 1, 2048>}, {transform_indices = @transform_2, window_bounds = array<i64: 1, 4, 1>}, {transform_indices = @transform_3, window_bounds = array<i64: 1, 4, 1>}, {transform_indices = @transform_4, window_bounds = array<i64: 1, 4, 1>}]} {
    %c0_i32 = arith.constant 0 : i32
    %0 = arith.cmpi eq, %arg1, %c0_i32 : i32
    %1 = arith.extui %0 : i1 to i32
    %c0_i32_0 = arith.constant 0 : i32
    %2 = arith.cmpi ne, %1, %c0_i32_0 : i32
    scf.if %2 {
      %cst_30 = arith.constant 0.000000e+00 : f32
      %45 = vector.broadcast %cst_30 : f32 to vector<4x1xf32>
      %c0_31 = arith.constant 0 : index
      %c0_32 = arith.constant 0 : index
      %c0_33 = arith.constant 0 : index
      %46 = vector.load %arg4[%c0_31, %c0_32, %c0_33] : memref<1x4x1xf32, #tpu.memory_space<vmem>>, vector<1x4x1xf32>
      %47 = vector.shape_cast %46 : vector<1x4x1xf32> to vector<4x1xf32>
      %48 = vector.shape_cast %45 : vector<4x1xf32> to vector<1x4x1xf32>
      tpu.vector_store %arg4[%c0_31, %c0_32, %c0_33], %48 {strides = array<i32>} : memref<1x4x1xf32, #tpu.memory_space<vmem>>, vector<1x4x1xf32>,
      %cst_34 = arith.constant 0.000000e+00 : f32
      %49 = vector.broadcast %cst_34 : f32 to vector<4x1xf32>
      %c0_35 = arith.constant 0 : index
      %c0_36 = arith.constant 0 : index
      %c0_37 = arith.constant 0 : index
      %50 = vector.load %arg5[%c0_35, %c0_36, %c0_37] : memref<1x4x1xf32, #tpu.memory_space<vmem>>, vector<1x4x1xf32>
      %51 = vector.shape_cast %50 : vector<1x4x1xf32> to vector<4x1xf32>
      %52 = vector.shape_cast %49 : vector<4x1xf32> to vector<1x4x1xf32>
      tpu.vector_store %arg5[%c0_35, %c0_36, %c0_37], %52 {strides = array<i32>} : memref<1x4x1xf32, #tpu.memory_space<vmem>>, vector<1x4x1xf32>,
      %cst_38 = arith.constant 0.000000e+00 : f32
      %53 = vector.broadcast %cst_38 : f32 to vector<4x1xf32>
      %c0_39 = arith.constant 0 : index
      %c0_40 = arith.constant 0 : index
      %c0_41 = arith.constant 0 : index
      %54 = vector.load %arg6[%c0_39, %c0_40, %c0_41] : memref<1x4x1xf32, #tpu.memory_space<vmem>>, vector<1x4x1xf32>
      %55 = vector.shape_cast %54 : vector<1x4x1xf32> to vector<4x1xf32>
      %56 = vector.shape_cast %53 : vector<4x1xf32> to vector<1x4x1xf32>
      tpu.vector_store %arg6[%c0_39, %c0_40, %c0_41], %56 {strides = array<i32>} : memref<1x4x1xf32, #tpu.memory_space<vmem>>, vector<1x4x1xf32>,
    } else {
    }
    %c0 = arith.constant 0 : index
    %c0_1 = arith.constant 0 : index
    %c0_2 = arith.constant 0 : index
    %3 = vector.load %arg2[%c0, %c0_1, %c0_2] : memref<1x4x2048xf32, #tpu.memory_space<vmem>>, vector<1x4x2048xf32>
    %4 = vector.shape_cast %3 : vector<1x4x2048xf32> to vector<4x2048xf32>
    %5 = arith.negf %4 : vector<4x2048xf32>
    %6 = math.exp %5 : vector<4x2048xf32>
    %cst = arith.constant 1.000000e+00 : f32
    %7 = vector.broadcast %cst : f32 to vector<4x2048xf32>
    %8 = arith.addf %7, %6 : vector<4x2048xf32>
    %9 = arith.divf %7, %8 : vector<4x2048xf32>
    %10 = tpu.iota {dimensions = array<i32: 0>} : vector<4x2048xi32>
    %c0_3 = arith.constant 0 : index
    %c0_4 = arith.constant 0 : index
    %c0_5 = arith.constant 0 : index
    %11 = vector.load %arg3[%c0_3, %c0_4, %c0_5] : memref<1x1x2048xi32, #tpu.memory_space<vmem>>, vector<1x1x2048xi32>
    %12 = vector.shape_cast %11 : vector<1x1x2048xi32> to vector<1x2048xi32>
    %13 = vector.broadcast %12 : vector<1x2048xi32> to vector<4x2048xi32>
    %14 = arith.cmpi eq, %13, %10 : vector<4x2048xi32>
    %c0_6 = arith.constant 0 : index
    %c0_7 = arith.constant 0 : index
    %c0_8 = arith.constant 0 : index
    %15 = vector.load %arg4[%c0_6, %c0_7, %c0_8] : memref<1x4x1xf32, #tpu.memory_space<vmem>>, vector<1x4x1xf32>
    %16 = vector.shape_cast %15 : vector<1x4x1xf32> to vector<4x1xf32>
    %cst_9 = arith.constant 0.000000e+00 : f32
    %17 = vector.broadcast %cst_9 : f32 to vector<4x2048xf32>
    %18 = arith.select %14, %9, %17 : vector<4x2048xi1>, vector<4x2048xf32>
    %cst_10 = arith.constant dense<0.000000e+00> : vector<4xf32>
    %19 = vector.multi_reduction <add>, %18, %cst_10 [1] : vector<4x2048xf32> to vector<4xf32>
    %20 = vector.shape_cast %19 : vector<4xf32> to vector<4x1xf32>
    %21 = arith.addf %16, %20 : vector<4x1xf32>
    %c0_11 = arith.constant 0 : index
    %c0_12 = arith.constant 0 : index
    %c0_13 = arith.constant 0 : index
    %22 = vector.load %arg4[%c0_11, %c0_12, %c0_13] : memref<1x4x1xf32, #tpu.memory_space<vmem>>, vector<1x4x1xf32>
    %23 = vector.shape_cast %22 : vector<1x4x1xf32> to vector<4x1xf32>
    %24 = vector.shape_cast %21 : vector<4x1xf32> to vector<1x4x1xf32>
    tpu.vector_store %arg4[%c0_11, %c0_12, %c0_13], %24 {strides = array<i32>} : memref<1x4x1xf32, #tpu.memory_space<vmem>>, vector<1x4x1xf32>,
    %c0_14 = arith.constant 0 : index
    %c0_15 = arith.constant 0 : index
    %c0_16 = arith.constant 0 : index
    %25 = vector.load %arg5[%c0_14, %c0_15, %c0_16] : memref<1x4x1xf32, #tpu.memory_space<vmem>>, vector<1x4x1xf32>
    %26 = vector.shape_cast %25 : vector<1x4x1xf32> to vector<4x1xf32>
    %27 = arith.mulf %9, %9 : vector<4x2048xf32>
    %cst_17 = arith.constant dense<0.000000e+00> : vector<4xf32>
    %28 = vector.multi_reduction <add>, %27, %cst_17 [1] : vector<4x2048xf32> to vector<4xf32>
    %29 = vector.shape_cast %28 : vector<4xf32> to vector<4x1xf32>
    %30 = arith.addf %26, %29 : vector<4x1xf32>
    %c0_18 = arith.constant 0 : index
    %c0_19 = arith.constant 0 : index
    %c0_20 = arith.constant 0 : index
    %31 = vector.load %arg5[%c0_18, %c0_19, %c0_20] : memref<1x4x1xf32, #tpu.memory_space<vmem>>, vector<1x4x1xf32>
    %32 = vector.shape_cast %31 : vector<1x4x1xf32> to vector<4x1xf32>
    %33 = vector.shape_cast %30 : vector<4x1xf32> to vector<1x4x1xf32>
    tpu.vector_store %arg5[%c0_18, %c0_19, %c0_20], %33 {strides = array<i32>} : memref<1x4x1xf32, #tpu.memory_space<vmem>>, vector<1x4x1xf32>,
    %c0_21 = arith.constant 0 : index
    %c0_22 = arith.constant 0 : index
    %c0_23 = arith.constant 0 : index
    %34 = vector.load %arg6[%c0_21, %c0_22, %c0_23] : memref<1x4x1xf32, #tpu.memory_space<vmem>>, vector<1x4x1xf32>
    %35 = vector.shape_cast %34 : vector<1x4x1xf32> to vector<4x1xf32>
    %cst_24 = arith.constant 1.000000e+00 : f32
    %cst_25 = arith.constant 0.000000e+00 : f32
    %36 = vector.broadcast %cst_24 : f32 to vector<4x2048xf32>
    %37 = vector.broadcast %cst_25 : f32 to vector<4x2048xf32>
    %38 = arith.select %14, %36, %37 : vector<4x2048xi1>, vector<4x2048xf32>
    %cst_26 = arith.constant dense<0.000000e+00> : vector<4xf32>
    %39 = vector.multi_reduction <add>, %38, %cst_26 [1] : vector<4x2048xf32> to vector<4xf32>
    %40 = vector.shape_cast %39 : vector<4xf32> to vector<4x1xf32>
    %41 = arith.addf %35, %40 : vector<4x1xf32>
    %c0_27 = arith.constant 0 : index
    %c0_28 = arith.constant 0 : index
    %c0_29 = arith.constant 0 : index
    %42 = vector.load %arg6[%c0_27, %c0_28, %c0_29] : memref<1x4x1xf32, #tpu.memory_space<vmem>>, vector<1x4x1xf32>
    %43 = vector.shape_cast %42 : vector<1x4x1xf32> to vector<4x1xf32>
    %44 = vector.shape_cast %41 : vector<4x1xf32> to vector<1x4x1xf32>
    tpu.vector_store %arg6[%c0_27, %c0_28, %c0_29], %44 {strides = array<i32>} : memref<1x4x1xf32, #tpu.memory_space<vmem>>, vector<1x4x1xf32>,
    return
  }
  func.func @transform_0(%arg0: i32, %arg1: i32) -> (i32, i32, i32) {
    %c0_i32 = arith.constant 0 : i32
    %c0_i32_0 = arith.constant 0 : i32
    return %arg0, %c0_i32, %arg1 : i32, i32, i32
  }
  func.func @transform_1(%arg0: i32, %arg1: i32) -> (i32, i32, i32) {
    %c0_i32 = arith.constant 0 : i32
    %c0_i32_0 = arith.constant 0 : i32
    return %arg0, %c0_i32, %arg1 : i32, i32, i32
  }
  func.func @transform_2(%arg0: i32, %arg1: i32) -> (i32, i32, i32) {
    %c0_i32 = arith.constant 0 : i32
    %c0_i32_0 = arith.constant 0 : i32
    %c0_i32_1 = arith.constant 0 : i32
    return %arg0, %c0_i32, %c0_i32_0 : i32, i32, i32
  }
  func.func @transform_3(%arg0: i32, %arg1: i32) -> (i32, i32, i32) {
    %c0_i32 = arith.constant 0 : i32
    %c0_i32_0 = arith.constant 0 : i32
    %c0_i32_1 = arith.constant 0 : i32
    return %arg0, %c0_i32, %c0_i32_0 : i32, i32, i32
  }
  func.func @transform_4(%arg0: i32, %arg1: i32) -> (i32, i32, i32) {
    %c0_i32 = arith.constant 0 : i32
    %c0_i32_0 = arith.constant 0 : i32
    %c0_i32_1 = arith.constant 0 : i32
    return %arg0, %c0_i32, %c0_i32_0 : i32, i32, i32
  }
}

</mosaic_0001>

<llo_original>
// kernel: tpu_custom_call.1
$region0: #{tpu_custom_call.1}
  #allocation0 [shape = 'u32[]', space=smem, size = 0x4, offset = 0x4, fixed_abs, tag = 'smem constant byte address 0x4 - core index']
  #allocation1 [shape = 'u32[144,128]{1,0:T(1,128)}', space=vmem, size = 0x12000, scoped, tag = 'internal scratch']
  %s0 = inlined_call_operand.hbm [shape: f32[2,4,2048], index: 0, kind: input, shape index: {}]
  %s1 = inlined_call_operand.hbm [shape: s32[2,1,2048], index: 1, kind: input, shape index: {}]
  %s2 = inlined_call_operand.vmem [shape: f32[2,4,1], index: 2, kind: output, shape index: {0}]
  %s3 = inlined_call_operand.vmem [shape: f32[2,4,1], index: 3, kind: output, shape index: {1}]
  %s4 = inlined_call_operand.vmem [shape: f32[2,4,1], index: 4, kind: output, shape index: {2}]
  %5 = xla_tuple %s2, %s3, %s4
  %s6 = sld [smem:[#allocation0]]
  $region69: #{tpu_custom_call.1} parent=0
    _
  %s8 = ssub.s32 1, %s6
  %s9 = scalar_select 0, %s8, %s6
  $region1: #{tpu_custom_call.1} parent=0
    #allocation2 [shape = 'u8[65536]{0}', space=vmem, size = 0x10000, scoped, tag = 'input window, operand 0']
    #allocation3 [shape = 's32[2]{0}', space=sflag, size = 0x8, scoped, tag = 'scoped memory for tpu_custom_call.1']
    #allocation4 [shape = 'u8[16384]{0}', space=vmem, size = 0x4000, scoped, tag = 'input window, operand 1']
    #allocation5 [shape = 's32[2]{0}', space=sflag, size = 0x8, scoped, tag = 'scoped memory for tpu_custom_call.1']
    %10 = vsyncpa [#allocation3], 0
    %s11 = scalar_lea.sflag [#allocation3], 1
    %12 = vsyncpa %s11, 0
    %13 = vsyncpa [#allocation5], 0
    %s14 = scalar_lea.sflag [#allocation5], 1
    %15 = vsyncpa %s14, 0
    loop: start=0, step=1, limit=4
    $region2: #{tpu_custom_call.1} parent=1 // loop_pre_header
      _
    $region3: #{tpu_custom_call.1} parent=1 // loop_header
      %s17 = sphi 0, %s21
      %p18 = scmp.ge.s32.totalorder %s17, 4
      %s24 = sphi 0, %s36
      %s25 = sphi 0, %s32
      %s26 = sphi 0, %s24
      %s27 = sphi 0, %s25
      %s28 = sphi 0, %s26
      %s29 = sphi 0, %s27
      %s41 = sphi 0, %s43
      %s44 = sphi 0, %s41
      %s45 = sphi 0, %s44
      %s61 = sphi 0, %s45
      %s69 = sphi 0, %s71
      %s72 = sphi 0, %s69
      %s73 = sphi 0, %s72
      %s89 = sphi 0, %s73
      %s95 = sphi 0, %s97
      %s98 = sphi 0, %s95
      %s99 = sphi 0, %s98
      %s115 = sphi 0, %s99
      %s121 = sphi 0, %s123
      %s124 = sphi 0, %s121
      %s125 = sphi 0, %s124
      %s141 = sphi 0, %s125
      %s147 = sphi 0, %s149
      %s150 = sphi 0, %s147
      %s151 = sphi 0, %s150
      %s167 = sphi 0, %s151
    $region4: #{tpu_custom_call.1} parent=1 // loop_header_branch
      %20 = sbr.rel (%p18) target = $region8
    $region5: #{tpu_custom_call.1} parent=1 // loop_body
      %s22 = ssub.s32 %s17, 1
      %s23 = ssub.s32 %s17, 2
      %s30 = sadd.s32 1, %s25
      %p31 = scmp.ge.s32.totalorder %s30, 1
      %s32 = scalar_select %p31, 0, %s30
      %s33 = sadd.s32 1, %s24
      %s34 = scalar_select %p31, %s33, %s24
      %p35 = scmp.ge.s32.totalorder %s34, 2
      %s36 = scalar_select %p35, 0, %s34
      %s37 = ssub.s32 %s24, %s36
      %s38 = ssub.s32 %s25, %s32
      %s39 = sor.u32 %s37, %s38
      %p40 = scmp.eq.s32.totalorder %s39, 0
      %s42 = sadd.s32 %s41, 1
      %s43 = scalar_select %p40, %s41, %s42
      %p46 = pneg %p40
      %p47 = scmp.eq.s32.totalorder %s17, 1
      %p48 = por %p46, %p47
      %p49 = scmp.ne.s32.totalorder %s41, %s44
      %p50 = scmp.eq.s32.totalorder %s17, 0
      %p51 = por %p49, %p50
      %p52 = scmp.ne.s32.totalorder %s41, %s44
      %p53 = scmp.eq.s32.totalorder %s22, 1
      %p54 = por %p52, %p53
      %p55 = scmp.ne.s32.totalorder %s44, %s45
      %p56 = scmp.eq.s32.totalorder %s22, 0
      %p57 = por %p55, %p56
      %p58 = scmp.ne.s32.totalorder %s44, %s45
      %p59 = scmp.eq.s32.totalorder %s23, 1
      %p60 = por %p58, %p59
      %p62 = scmp.ne.s32.totalorder %s45, %s61
      %p63 = scmp.eq.s32.totalorder %s23, 0
      %p64 = por %p62, %p63
      %s65 = ssub.s32 %s24, %s36
      %s66 = ssub.s32 %s25, %s32
      %s67 = sor.u32 %s65, %s66
      %p68 = scmp.eq.s32.totalorder %s67, 0
      %s70 = sadd.s32 %s69, 1
      %s71 = scalar_select %p68, %s69, %s70
      %p74 = pneg %p68
      %p75 = scmp.eq.s32.totalorder %s17, 1
      %p76 = por %p74, %p75
      %p77 = scmp.ne.s32.totalorder %s69, %s72
      %p78 = scmp.eq.s32.totalorder %s17, 0
      %p79 = por %p77, %p78
      %p80 = scmp.ne.s32.totalorder %s69, %s72
      %p81 = scmp.eq.s32.totalorder %s22, 1
      %p82 = por %p80, %p81
      %p83 = scmp.ne.s32.totalorder %s72, %s73
      %p84 = scmp.eq.s32.totalorder %s22, 0
      %p85 = por %p83, %p84
      %p86 = scmp.ne.s32.totalorder %s72, %s73
      %p87 = scmp.eq.s32.totalorder %s23, 1
      %p88 = por %p86, %p87
      %p90 = scmp.ne.s32.totalorder %s73, %s89
      %p91 = scmp.eq.s32.totalorder %s23, 0
      %p92 = por %p90, %p91
      %s93 = ssub.s32 %s24, %s36
      %p94 = scmp.eq.s32.totalorder %s93, 0
      %s96 = sadd.s32 %s95, 1
      %s97 = scalar_select %p94, %s95, %s96
      %p100 = pneg %p94
      %p101 = scmp.eq.s32.totalorder %s17, 1
      %p102 = por %p100, %p101
      %p103 = scmp.ne.s32.totalorder %s95, %s98
      %p104 = scmp.eq.s32.totalorder %s17, 0
      %p105 = por %p103, %p104
      %p106 = scmp.ne.s32.totalorder %s95, %s98
      %p107 = scmp.eq.s32.totalorder %s22, 1
      %p108 = por %p106, %p107
      %p109 = scmp.ne.s32.totalorder %s98, %s99
      %p110 = scmp.eq.s32.totalorder %s22, 0
      %p111 = por %p109, %p110
      %p112 = scmp.ne.s32.totalorder %s98, %s99
      %p113 = scmp.eq.s32.totalorder %s23, 1
      %p114 = por %p112, %p113
      %p116 = scmp.ne.s32.totalorder %s99, %s115
      %p117 = scmp.eq.s32.totalorder %s23, 0
      %p118 = por %p116, %p117
      %s119 = ssub.s32 %s24, %s36
      %p120 = scmp.eq.s32.totalorder %s119, 0
      %s122 = sadd.s32 %s121, 1
      %s123 = scalar_select %p120, %s121, %s122
      %p126 = pneg %p120
      %p127 = scmp.eq.s32.totalorder %s17, 1
      %p128 = por %p126, %p127
      %p129 = scmp.ne.s32.totalorder %s121, %s124
      %p130 = scmp.eq.s32.totalorder %s17, 0
      %p131 = por %p129, %p130
      %p132 = scmp.ne.s32.totalorder %s121, %s124
      %p133 = scmp.eq.s32.totalorder %s22, 1
      %p134 = por %p132, %p133
      %p135 = scmp.ne.s32.totalorder %s124, %s125
      %p136 = scmp.eq.s32.totalorder %s22, 0
      %p137 = por %p135, %p136
      %p138 = scmp.ne.s32.totalorder %s124, %s125
      %p139 = scmp.eq.s32.totalorder %s23, 1
      %p140 = por %p138, %p139
      %p142 = scmp.ne.s32.totalorder %s125, %s141
      %p143 = scmp.eq.s32.totalorder %s23, 0
      %p144 = por %p142, %p143
      %s145 = ssub.s32 %s24, %s36
      %p146 = scmp.eq.s32.totalorder %s145, 0
      %s148 = sadd.s32 %s147, 1
      %s149 = scalar_select %p146, %s147, %s148
      %p152 = pneg %p146
      %p153 = scmp.eq.s32.totalorder %s17, 1
      %p154 = por %p152, %p153
      %p155 = scmp.ne.s32.totalorder %s147, %s150
      %p156 = scmp.eq.s32.totalorder %s17, 0
      %p157 = por %p155, %p156
      %p158 = scmp.ne.s32.totalorder %s147, %s150
      %p159 = scmp.eq.s32.totalorder %s22, 1
      %p160 = por %p158, %p159
      %p161 = scmp.ne.s32.totalorder %s150, %s151
      %p162 = scmp.eq.s32.totalorder %s22, 0
      %p163 = por %p161, %p162
      %p164 = scmp.ne.s32.totalorder %s150, %s151
      %p165 = scmp.eq.s32.totalorder %s23, 1
      %p166 = por %p164, %p165
      %p168 = scmp.ne.s32.totalorder %s151, %s167
      %p169 = scmp.eq.s32.totalorder %s23, 0
      %p170 = por %p168, %p169
      %p171 = scmp.le.s32.totalorder 1, %s17
      %p172 = scmp.lt.s32.totalorder %s17, 3
      %p173 = pnand %p171, %p172
      %p174 = pneg %p173
      // Predicated region
      $region9: #{tpu_custom_call.1} parent=5 // pred_check
        _
      $region10: #{tpu_custom_call.1} parent=5 // pred_check_branch
        %176 = sbr.rel (%p173) target = $region12
      $region11: #{tpu_custom_call.1} parent=5 // pred_region
        %s177 = ssub.s32 %s17, 1
      $region12: #{tpu_custom_call.1} parent=5 // pred_fallthru
        _
      %p178 = scmp.lt.s32.totalorder %s17, 2
      // Predicated region
      $region13: #{tpu_custom_call.1} parent=5 // pred_check
        %p179 = pneg %p178
      $region14: #{tpu_custom_call.1} parent=5 // pred_check_branch
        %181 = sbr.rel (%p179) target = $region16
      $region15: #{tpu_custom_call.1} parent=5 // pred_region
        // Predicated region
        $region17: #{tpu_custom_call.1} parent=15 // pred_check
          %p182 = pneg %p51
        $region18: #{tpu_custom_call.1} parent=15 // pred_check_branch
          %184 = sbr.rel (%p182) target = $region20
        $region19: #{tpu_custom_call.1} parent=15 // pred_region
          %s185 = sand.u32 %s41, 1
          %s186 = scalar_lea.sflag [#allocation3], %s185
          %s187 = sand.u32 %s41, 1
          %s188 = smul.addr %s187, 64
          %s189 = scalar_lea.vmem [#allocation2], %s188
          %s190 = smul.u32 16, %s25
          %s192 = ssub.s32 1024, 1024
          %193 = vsyncadd %s186, %s192
          %s194 = smul.addr %s24, 16
          %s195 = sadd.s32 %s190, %s194
          %s196 = smul.addr %s195, 64
          %s197 = scalar_lea.hbm %s0, %s196
          %s199 = sshll.u32 %s189, 4
          %s200 = int_to_ptr.vmem [resolvable:$true] %s199
          %202 = dma.hbm_to_vmem [thread:$0]  %s197, 1024, %s200, %s186
        $region20: #{tpu_custom_call.1} parent=15 // pred_fallthru
          _
        // Predicated region
        $region21: #{tpu_custom_call.1} parent=15 // pred_check
          %p203 = pneg %p79
        $region22: #{tpu_custom_call.1} parent=15 // pred_check_branch
          %205 = sbr.rel (%p203) target = $region24
        $region23: #{tpu_custom_call.1} parent=15 // pred_region
          %s206 = sand.u32 %s69, 1
          %s207 = scalar_lea.sflag [#allocation5], %s206
          %s208 = sand.u32 %s69, 1
          %s209 = smul.addr %s208, 16
          %s210 = scalar_lea.vmem [#allocation4], %s209
          %s211 = smul.u32 16, %s25
          %s213 = ssub.s32 256, 256
          %214 = vsyncadd %s207, %s213
          %s215 = smul.addr %s24, 16
          %s216 = sadd.s32 %s211, %s215
          %s217 = smul.addr %s216, 16
          %s218 = scalar_lea.hbm %s1, %s217
          %s220 = sshll.u32 %s210, 4
          %s221 = int_to_ptr.vmem [resolvable:$true] %s220
          %223 = dma.hbm_to_vmem [thread:$0]  %s218, 256, %s221, %s207
        $region24: #{tpu_custom_call.1} parent=15 // pred_fallthru
          _
      $region16: #{tpu_custom_call.1} parent=5 // pred_fallthru
        _
      %p224 = scmp.le.s32.totalorder 1, %s17
      %p225 = scmp.lt.s32.totalorder %s17, 3
      %p226 = pnand %p224, %p225
      %p227 = pneg %p226
      // Predicated region
      $region25: #{tpu_custom_call.1} parent=5 // pred_check
        _
      $region26: #{tpu_custom_call.1} parent=5 // pred_check_branch
        %229 = sbr.rel (%p226) target = $region28
      $region27: #{tpu_custom_call.1} parent=5 // pred_region
        %s230 = ssub.s32 %s17, 1
        %s231 = sand.u32 %s44, 1
        %s232 = scalar_lea.sflag [#allocation3], %s231
        %s233 = sand.u32 %s44, 1
        %s234 = smul.addr %s233, 64
        %s235 = scalar_lea.vmem [#allocation2], %s234
        // Predicated region
        $region29: #{tpu_custom_call.1} parent=27 // pred_check
          %p236 = pneg %p57
        $region30: #{tpu_custom_call.1} parent=27 // pred_check_branch
          %238 = sbr.rel (%p236) target = $region32
        $region31: #{tpu_custom_call.1} parent=27 // pred_region
          %239 = dma.done %s232, 1024
        $region32: #{tpu_custom_call.1} parent=27 // pred_fallthru
          _
        %s240 = sand.u32 %s72, 1
        %s241 = scalar_lea.sflag [#allocation5], %s240
        %s242 = sand.u32 %s72, 1
        %s243 = smul.addr %s242, 16
        %s244 = scalar_lea.vmem [#allocation4], %s243
        // Predicated region
        $region33: #{tpu_custom_call.1} parent=27 // pred_check
          %p245 = pneg %p85
        $region34: #{tpu_custom_call.1} parent=27 // pred_check_branch
          %247 = sbr.rel (%p245) target = $region36
        $region35: #{tpu_custom_call.1} parent=27 // pred_region
          %248 = dma.done %s241, 256
        $region36: #{tpu_custom_call.1} parent=27 // pred_fallthru
          _
        %s249 = sand.u32 %s44, 1
        %s250 = scalar_lea.sflag [#allocation3], %s249
        %s251 = sand.u32 %s44, 1
        %s252 = smul.addr %s251, 64
        %s253 = scalar_lea.vmem [#allocation2], %s252
        %p254 = pneg %p57
        %p255 = pneg %p54
        %s256 = sand.u32 %s72, 1
        %s257 = scalar_lea.sflag [#allocation5], %s256
        %s258 = sand.u32 %s72, 1
        %s259 = smul.addr %s258, 16
        %s260 = scalar_lea.vmem [#allocation4], %s259
        %p261 = pneg %p85
        %p262 = pneg %p82
        %p263 = pneg %p111
        %p264 = pneg %p108
        %p265 = scmp.lt.s32.totalorder %s26, 1
        %s266 = scalar_select %p265, %s26, 1
        %s267 = smul.addr %s266, 4
        %s268 = scalar_lea.vmem %s2, %s267
        %p269 = pneg %p137
        %p270 = pneg %p134
        %p271 = scmp.lt.s32.totalorder %s26, 1
        %s272 = scalar_select %p271, %s26, 1
        %s273 = smul.addr %s272, 4
        %s274 = scalar_lea.vmem %s3, %s273
        %p275 = pneg %p163
        %p276 = pneg %p160
        %p277 = scmp.lt.s32.totalorder %s26, 1
        %s278 = scalar_select %p277, %s26, 1
        %s279 = smul.addr %s278, 4
        %s280 = scalar_lea.vmem %s4, %s279
        %s281 = smul.u32 16, %s27
        %s282 = smul.u32 16, %s27
        %p283 = scmp.lt.s32.totalorder %s26, 1
        %s284 = scalar_select %p283, %s26, 1
        %s285 = smul.addr %s284, 4
        %s286 = scalar_lea.vmem %s2, %s285
        %p287 = scmp.lt.s32.totalorder %s26, 1
        %s288 = scalar_select %p287, %s26, 1
        %s289 = smul.addr %s288, 4
        %s290 = scalar_lea.vmem %s3, %s289
        %p291 = scmp.lt.s32.totalorder %s26, 1
        %s292 = scalar_select %p291, %s26, 1
        %s293 = smul.addr %s292, 4
        %s294 = scalar_lea.vmem %s4, %s293
        %p295 = scmp.eq.s32.totalorder %s27, 0
        // Predicated region
        $region37: #{tpu_custom_call.1} parent=27 // pred_check
          %p296 = pneg %p295
        $region38: #{tpu_custom_call.1} parent=27 // pred_check_branch
          %298 = sbr.rel (%p296) target = $region40
        $region39: #{tpu_custom_call.1} parent=27 // pred_region
          %vm299 = vcmask 3072
          %300 = vst.msk [vmem:[%s286] sm:$0xf] %vm299, 0.0
          %301 = vst.msk [vmem:[%s290] sm:$0xf] %vm299, 0.0
          %302 = vst.msk [vmem:[%s294] sm:$0xf] %vm299, 0.0
        $region40: #{tpu_custom_call.1} parent=27 // pred_fallthru
          _
        %v303 = vld [vmem:[%s235] sm:$0xff]
        %v304 = vld [vmem:[%s235 + $0x8] sm:$0xff]
        %v305 = vld [vmem:[%s235 + $0x10] sm:$0xff]
        %v306 = vld [vmem:[%s235 + $0x18] sm:$0xff]
        %v307 = vld [vmem:[%s235 + $0x20] sm:$0xff]
        %v308 = vld [vmem:[%s235 + $0x28] sm:$0xff]
        %v309 = vld [vmem:[%s235 + $0x30] sm:$0xff]
        %v310 = vld [vmem:[%s235 + $0x38] sm:$0xff]
        %v311 = vxor.u32 %v303, 2147483648
        %v312 = vxor.u32 %v304, 2147483648
        %v313 = vxor.u32 %v305, 2147483648
        %v314 = vxor.u32 %v306, 2147483648
        %v315 = vxor.u32 %v307, 2147483648
        %v316 = vxor.u32 %v308, 2147483648
        %v317 = vxor.u32 %v309, 2147483648
        %v318 = vxor.u32 %v310, 2147483648
        %v319 = vmul.f32 %v311, 1.442695
        %v320 = vpow.pop %v319
        %v321 = vmul.f32 %v312, 1.442695
        %v322 = vpow.pop %v321
        %v323 = vmul.f32 %v313, 1.442695
        %v324 = vpow.pop %v323
        %v325 = vmul.f32 %v314, 1.442695
        %v326 = vpow.pop %v325
        %v327 = vmul.f32 %v315, 1.442695
        %v328 = vpow.pop %v327
        %v329 = vmul.f32 %v316, 1.442695
        %v330 = vpow.pop %v329
        %v331 = vmul.f32 %v317, 1.442695
        %v332 = vpow.pop %v331
        %v333 = vmul.f32 %v318, 1.442695
        %v334 = vpow.pop %v333
        %v335 = vadd.f32 %v320, 1.0
        %v336 = vadd.f32 %v322, 1.0
        %v337 = vadd.f32 %v324, 1.0
        %v338 = vadd.f32 %v326, 1.0
        %v339 = vadd.f32 %v328, 1.0
        %v340 = vadd.f32 %v330, 1.0
        %v341 = vadd.f32 %v332, 1.0
        %v342 = vadd.f32 %v334, 1.0
        %v343 = vrcp.pop %v335
        %v344 = vmul.f32 1.0, %v343
        %v345 = vrcp.pop %v336
        %v346 = vmul.f32 1.0, %v345
        %v347 = vrcp.pop %v337
        %v348 = vmul.f32 1.0, %v347
        %v349 = vrcp.pop %v338
        %v350 = vmul.f32 1.0, %v349
        %v351 = vrcp.pop %v339
        %v352 = vmul.f32 1.0, %v351
        %v353 = vrcp.pop %v340
        %v354 = vmul.f32 1.0, %v353
        %v355 = vrcp.pop %v341
        %v356 = vmul.f32 1.0, %v355
        %v357 = vrcp.pop %v342
        %v358 = vmul.f32 1.0, %v357
        %v359 = vlaneseq
        %v360 = vshrl.u32 %v359, 7
        %v361 = vld [vmem:[%s244] sm:$0xff]
        %v362 = vld [vmem:[%s244 + $0x8] sm:$0xff]
        %v363 = vlaneseq
        %v364 = vshrl.u32 %v363, 7
        %v365 = vsub.s32 0, %v364
        %v366 = vrot.slane %v361, %v365
        %v367 = vlaneseq
        %v368 = vshrl.u32 %v367, 7
        %v369 = vsub.s32 1, %v368
        %v370 = vrot.slane %v361, %v369
        %v371 = vlaneseq
        %v372 = vshrl.u32 %v371, 7
        %v373 = vsub.s32 2, %v372
        %v374 = vrot.slane %v361, %v373
        %v375 = vlaneseq
        %v376 = vshrl.u32 %v375, 7
        %v377 = vsub.s32 3, %v376
        %v378 = vrot.slane %v361, %v377
        %v379 = vlaneseq
        %v380 = vshrl.u32 %v379, 7
        %v381 = vsub.s32 4, %v380
        %v382 = vrot.slane %v361, %v381
        %v383 = vlaneseq
        %v384 = vshrl.u32 %v383, 7
        %v385 = vsub.s32 5, %v384
        %v386 = vrot.slane %v361, %v385
        %v387 = vlaneseq
        %v388 = vshrl.u32 %v387, 7
        %v389 = vsub.s32 6, %v388
        %v390 = vrot.slane %v361, %v389
        %v391 = vlaneseq
        %v392 = vshrl.u32 %v391, 7
        %v393 = vsub.s32 7, %v392
        %v394 = vrot.slane %v361, %v393
        %v395 = vlaneseq
        %v396 = vshrl.u32 %v395, 7
        %v397 = vsub.s32 0, %v396
        %v398 = vrot.slane %v362, %v397
        %v399 = vlaneseq
        %v400 = vshrl.u32 %v399, 7
        %v401 = vsub.s32 1, %v400
        %v402 = vrot.slane %v362, %v401
        %v403 = vlaneseq
        %v404 = vshrl.u32 %v403, 7
        %v405 = vsub.s32 2, %v404
        %v406 = vrot.slane %v362, %v405
        %v407 = vlaneseq
        %v408 = vshrl.u32 %v407, 7
        %v409 = vsub.s32 3, %v408
        %v410 = vrot.slane %v362, %v409
        %v411 = vlaneseq
        %v412 = vshrl.u32 %v411, 7
        %v413 = vsub.s32 4, %v412
        %v414 = vrot.slane %v362, %v413
        %v415 = vlaneseq
        %v416 = vshrl.u32 %v415, 7
        %v417 = vsub.s32 5, %v416
        %v418 = vrot.slane %v362, %v417
        %v419 = vlaneseq
        %v420 = vshrl.u32 %v419, 7
        %v421 = vsub.s32 6, %v420
        %v422 = vrot.slane %v362, %v421
        %v423 = vlaneseq
        %v424 = vshrl.u32 %v423, 7
        %v425 = vsub.s32 7, %v424
        %v426 = vrot.slane %v362, %v425
        %vm427 = vcmp.eq.s32.totalorder %v366, %v360
        %vm428 = vcmp.eq.s32.totalorder %v370, %v360
        %vm429 = vcmp.eq.s32.totalorder %v374, %v360
        %vm430 = vcmp.eq.s32.totalorder %v378, %v360
        %vm431 = vcmp.eq.s32.totalorder %v382, %v360
        %vm432 = vcmp.eq.s32.totalorder %v386, %v360
        %vm433 = vcmp.eq.s32.totalorder %v390, %v360
        %vm434 = vcmp.eq.s32.totalorder %v394, %v360
        %vm435 = vcmp.eq.s32.totalorder %v398, %v360
        %vm436 = vcmp.eq.s32.totalorder %v402, %v360
        %vm437 = vcmp.eq.s32.totalorder %v406, %v360
        %vm438 = vcmp.eq.s32.totalorder %v410, %v360
        %vm439 = vcmp.eq.s32.totalorder %v414, %v360
        %vm440 = vcmp.eq.s32.totalorder %v418, %v360
        %vm441 = vcmp.eq.s32.totalorder %v422, %v360
        %vm442 = vcmp.eq.s32.totalorder %v426, %v360
        %v443 = vld [vmem:[%s286] sm:$0xf]
        %v452 = vcombine.high %v344, %v344
        %v453 = vcombine.high %v346, %v346
        %v454 = vcombine.high %v348, %v348
        %v455 = vcombine.high %v350, %v350
        %v456 = vcombine.high %v352, %v352
        %v457 = vcombine.high %v354, %v354
        %v458 = vcombine.high %v356, %v356
        %v459 = vcombine.high %v358, %v358
        %v468 = vsel %vm427, %v344, 0.0
        %v469 = vsel %vm428, %v452, 0.0
        %v470 = vsel %vm429, %v346, 0.0
        %v471 = vsel %vm430, %v453, 0.0
        %v472 = vsel %vm431, %v348, 0.0
        %v473 = vsel %vm432, %v454, 0.0
        %v474 = vsel %vm433, %v350, 0.0
        %v475 = vsel %vm434, %v455, 0.0
        %v476 = vsel %vm435, %v352, 0.0
        %v477 = vsel %vm436, %v456, 0.0
        %v478 = vsel %vm437, %v354, 0.0
        %v479 = vsel %vm438, %v457, 0.0
        %v480 = vsel %vm439, %v356, 0.0
        %v481 = vsel %vm440, %v458, 0.0
        %v482 = vsel %vm441, %v358, 0.0
        %v483 = vsel %vm442, %v459, 0.0
        %vm484 = vcmask 1043456
        %v485 = vsel %vm484, %v468, 0.0
        %v486 = vsel %vm484, %v469, 0.0
        %v487 = vadd.f32 %v485, %v486
        %v488 = vsel %vm484, %v470, 0.0
        %v489 = vadd.f32 %v487, %v488
        %v490 = vsel %vm484, %v471, 0.0
        %v491 = vadd.f32 %v489, %v490
        %v492 = vsel %vm484, %v472, 0.0
        %v493 = vadd.f32 %v491, %v492
        %v494 = vsel %vm484, %v473, 0.0
        %v495 = vadd.f32 %v493, %v494
        %v496 = vsel %vm484, %v474, 0.0
        %v497 = vadd.f32 %v495, %v496
        %v498 = vsel %vm484, %v475, 0.0
        %v499 = vadd.f32 %v497, %v498
        %v500 = vsel %vm484, %v476, 0.0
        %v501 = vadd.f32 %v499, %v500
        %v502 = vsel %vm484, %v477, 0.0
        %v503 = vadd.f32 %v501, %v502
        %v504 = vsel %vm484, %v478, 0.0
        %v505 = vadd.f32 %v503, %v504
        %v506 = vsel %vm484, %v479, 0.0
        %v507 = vadd.f32 %v505, %v506
        %v508 = vsel %vm484, %v480, 0.0
        %v509 = vadd.f32 %v507, %v508
        %v510 = vsel %vm484, %v481, 0.0
        %v511 = vadd.f32 %v509, %v510
        %v512 = vsel %vm484, %v482, 0.0
        %v513 = vadd.f32 %v511, %v512
        %v514 = vsel %vm484, %v483, 0.0
        %v515 = vadd.f32 %v513, %v514
        %516 = vadd.xlane.f32.xlu0 %v515
        %v517 = vpop.xlane.xlu0 %516
        %v518 = vadd.f32 %v443, %v517
        %vm519 = vcmask 3072
        %520 = vst.msk [vmem:[%s286] sm:$0xf] %vm519, %v518
        %v521 = vld [vmem:[%s290] sm:$0xf]
        %v522 = vmul.f32 %v344, %v344
        %v523 = vmul.f32 %v346, %v346
        %v524 = vmul.f32 %v348, %v348
        %v525 = vmul.f32 %v350, %v350
        %v526 = vmul.f32 %v352, %v352
        %v527 = vmul.f32 %v354, %v354
        %v528 = vmul.f32 %v356, %v356
        %v529 = vmul.f32 %v358, %v358
        %v538 = vcombine.high %v522, %v522
        %v539 = vcombine.high %v523, %v523
        %v540 = vcombine.high %v524, %v524
        %v541 = vcombine.high %v525, %v525
        %v542 = vcombine.high %v526, %v526
        %v543 = vcombine.high %v527, %v527
        %v544 = vcombine.high %v528, %v528
        %v545 = vcombine.high %v529, %v529
        %v554 = vsel %vm484, %v522, 0.0
        %v555 = vsel %vm484, %v538, 0.0
        %v556 = vadd.f32 %v554, %v555
        %v557 = vsel %vm484, %v523, 0.0
        %v558 = vadd.f32 %v556, %v557
        %v559 = vsel %vm484, %v539, 0.0
        %v560 = vadd.f32 %v558, %v559
        %v561 = vsel %vm484, %v524, 0.0
        %v562 = vadd.f32 %v560, %v561
        %v563 = vsel %vm484, %v540, 0.0
        %v564 = vadd.f32 %v562, %v563
        %v565 = vsel %vm484, %v525, 0.0
        %v566 = vadd.f32 %v564, %v565
        %v567 = vsel %vm484, %v541, 0.0
        %v568 = vadd.f32 %v566, %v567
        %v569 = vsel %vm484, %v526, 0.0
        %v570 = vadd.f32 %v568, %v569
        %v571 = vsel %vm484, %v542, 0.0
        %v572 = vadd.f32 %v570, %v571
        %v573 = vsel %vm484, %v527, 0.0
        %v574 = vadd.f32 %v572, %v573
        %v575 = vsel %vm484, %v543, 0.0
        %v576 = vadd.f32 %v574, %v575
        %v577 = vsel %vm484, %v528, 0.0
        %v578 = vadd.f32 %v576, %v577
        %v579 = vsel %vm484, %v544, 0.0
        %v580 = vadd.f32 %v578, %v579
        %v581 = vsel %vm484, %v529, 0.0
        %v582 = vadd.f32 %v580, %v581
        %v583 = vsel %vm484, %v545, 0.0
        %v584 = vadd.f32 %v582, %v583
        %585 = vadd.xlane.f32.xlu0 %v584
        %v586 = vpop.xlane.xlu0 %585
        %v587 = vadd.f32 %v521, %v586
        %588 = vst.msk [vmem:[%s290] sm:$0xf] %vm519, %v587
        %v589 = vld [vmem:[%s294] sm:$0xf]
        %v590 = vsel %vm427, 1.0, 0.0
        %v591 = vsel %vm428, 1.0, 0.0
        %v592 = vsel %vm429, 1.0, 0.0
        %v593 = vsel %vm430, 1.0, 0.0
        %v594 = vsel %vm431, 1.0, 0.0
        %v595 = vsel %vm432, 1.0, 0.0
        %v596 = vsel %vm433, 1.0, 0.0
        %v597 = vsel %vm434, 1.0, 0.0
        %v598 = vsel %vm435, 1.0, 0.0
        %v599 = vsel %vm436, 1.0, 0.0
        %v600 = vsel %vm437, 1.0, 0.0
        %v601 = vsel %vm438, 1.0, 0.0
        %v602 = vsel %vm439, 1.0, 0.0
        %v603 = vsel %vm440, 1.0, 0.0
        %v604 = vsel %vm441, 1.0, 0.0
        %v605 = vsel %vm442, 1.0, 0.0
        %v606 = vsel %vm484, %v590, 0.0
        %v607 = vsel %vm484, %v591, 0.0
        %v608 = vadd.f32 %v606, %v607
        %v609 = vsel %vm484, %v592, 0.0
        %v610 = vadd.f32 %v608, %v609
        %v611 = vsel %vm484, %v593, 0.0
        %v612 = vadd.f32 %v610, %v611
        %v613 = vsel %vm484, %v594, 0.0
        %v614 = vadd.f32 %v612, %v613
        %v615 = vsel %vm484, %v595, 0.0
        %v616 = vadd.f32 %v614, %v615
        %v617 = vsel %vm484, %v596, 0.0
        %v618 = vadd.f32 %v616, %v617
        %v619 = vsel %vm484, %v597, 0.0
        %v620 = vadd.f32 %v618, %v619
        %v621 = vsel %vm484, %v598, 0.0
        %v622 = vadd.f32 %v620, %v621
        %v623 = vsel %vm484, %v599, 0.0
        %v624 = vadd.f32 %v622, %v623
        %v625 = vsel %vm484, %v600, 0.0
        %v626 = vadd.f32 %v624, %v625
        %v627 = vsel %vm484, %v601, 0.0
        %v628 = vadd.f32 %v626, %v627
        %v629 = vsel %vm484, %v602, 0.0
        %v630 = vadd.f32 %v628, %v629
        %v631 = vsel %vm484, %v603, 0.0
        %v632 = vadd.f32 %v630, %v631
        %v633 = vsel %vm484, %v604, 0.0
        %v634 = vadd.f32 %v632, %v633
        %v635 = vsel %vm484, %v605, 0.0
        %v636 = vadd.f32 %v634, %v635
        %637 = vadd.xlane.f32.xlu0 %v636
        %v638 = vpop.xlane.xlu0 %637
        %v639 = vadd.f32 %v589, %v638
        %640 = vst.msk [vmem:[%s294] sm:$0xf] %vm519, %v639
        %p641 = scmp.lt.s32.totalorder %s26, 1
        %s642 = scalar_select %p641, %s26, 1
        %s643 = smul.addr %s642, 4
        %s644 = scalar_lea.vmem %s2, %s643
        %p645 = scmp.lt.s32.totalorder %s26, 1
        %s646 = scalar_select %p645, %s26, 1
        %s647 = smul.addr %s646, 4
        %s648 = scalar_lea.vmem %s3, %s647
        %p649 = scmp.lt.s32.totalorder %s26, 1
        %s650 = scalar_select %p649, %s26, 1
        %s651 = smul.addr %s650, 4
        %s652 = scalar_lea.vmem %s4, %s651
        // Predicated region
        $region41: #{tpu_custom_call.1} parent=27 // pred_check
          %p653 = pneg %p108
        $region42: #{tpu_custom_call.1} parent=27 // pred_check_branch
          %655 = sbr.rel (%p653) target = $region44
        $region43: #{tpu_custom_call.1} parent=27 // pred_region
          _
        $region44: #{tpu_custom_call.1} parent=27 // pred_fallthru
          _
        // Predicated region
        $region45: #{tpu_custom_call.1} parent=27 // pred_check
          %p656 = pneg %p134
        $region46: #{tpu_custom_call.1} parent=27 // pred_check_branch
          %658 = sbr.rel (%p656) target = $region48
        $region47: #{tpu_custom_call.1} parent=27 // pred_region
          _
        $region48: #{tpu_custom_call.1} parent=27 // pred_fallthru
          _
        // Predicated region
        $region49: #{tpu_custom_call.1} parent=27 // pred_check
          %p659 = pneg %p160
        $region50: #{tpu_custom_call.1} parent=27 // pred_check_branch
          %661 = sbr.rel (%p659) target = $region52
        $region51: #{tpu_custom_call.1} parent=27 // pred_region
          _
        $region52: #{tpu_custom_call.1} parent=27 // pred_fallthru
          _
      $region28: #{tpu_custom_call.1} parent=5 // pred_fallthru
        _
      %p662 = scmp.le.s32.totalorder 2, %s17
      // Predicated region
      $region53: #{tpu_custom_call.1} parent=5 // pred_check
        %p663 = pneg %p662
      $region54: #{tpu_custom_call.1} parent=5 // pred_check_branch
        %665 = sbr.rel (%p663) target = $region56
      $region55: #{tpu_custom_call.1} parent=5 // pred_region
        %s666 = ssub.s32 %s17, 2
        // Predicated region
        $region57: #{tpu_custom_call.1} parent=55 // pred_check
          %p667 = pneg %p114
        $region58: #{tpu_custom_call.1} parent=55 // pred_check_branch
          %669 = sbr.rel (%p667) target = $region60
        $region59: #{tpu_custom_call.1} parent=55 // pred_region
          %p670 = scmp.lt.s32.totalorder %s28, 1
          %s671 = scalar_select %p670, %s28, 1
          %s672 = smul.addr %s671, 4
          %s673 = scalar_lea.vmem %s2, %s672
        $region60: #{tpu_custom_call.1} parent=55 // pred_fallthru
          _
        // Predicated region
        $region61: #{tpu_custom_call.1} parent=55 // pred_check
          %p674 = pneg %p140
        $region62: #{tpu_custom_call.1} parent=55 // pred_check_branch
          %676 = sbr.rel (%p674) target = $region64
        $region63: #{tpu_custom_call.1} parent=55 // pred_region
          %p677 = scmp.lt.s32.totalorder %s28, 1
          %s678 = scalar_select %p677, %s28, 1
          %s679 = smul.addr %s678, 4
          %s680 = scalar_lea.vmem %s3, %s679
        $region64: #{tpu_custom_call.1} parent=55 // pred_fallthru
          _
        // Predicated region
        $region65: #{tpu_custom_call.1} parent=55 // pred_check
          %p681 = pneg %p166
        $region66: #{tpu_custom_call.1} parent=55 // pred_check_branch
          %683 = sbr.rel (%p681) target = $region68
        $region67: #{tpu_custom_call.1} parent=55 // pred_region
          %p684 = scmp.lt.s32.totalorder %s28, 1
          %s685 = scalar_select %p684, %s28, 1
          %s686 = smul.addr %s685, 4
          %s687 = scalar_lea.vmem %s4, %s686
        $region68: #{tpu_custom_call.1} parent=55 // pred_fallthru
          _
      $region56: #{tpu_custom_call.1} parent=5 // pred_fallthru
        _
    $region6: #{tpu_custom_call.1} parent=1 // loop_footer
      %s21 = sadd.s32 1, %s17
    $region7: #{tpu_custom_call.1} parent=1 // loop_footer_branch
      %16 = sbr.rel target = $region3
    $region8: #{tpu_custom_call.1} parent=1 // loop_exit
      _
    %688 = vsyncpa [#allocation3], 1
    %s689 = scalar_lea.sflag [#allocation3], 1
    %690 = vsyncpa %s689, 1
    %691 = vsyncpa [#allocation5], 1
    %s692 = scalar_lea.sflag [#allocation5], 1
    %693 = vsyncpa %s692, 1

</llo_original>
